<compile_context>
chip_gen: v7x
topology: tpu7x:2x2x1
jax: 0.10.0
libtpu: 0.0.40
codegen_flags: <defaults>
</compile_context>

<pallas_src>
import functools

import jax
import jax.numpy as jnp
from jax.experimental import pallas as pl
from jax.experimental.pallas import tpu as pltpu

EPS = 1e-5


def _sublayer_kernel(x_ref, w_ref, b_ref, g_ref, be_ref, o_ref, acc_ref, *,
                     nk, tk):
    # x_ref: (TM, D)   w_ref: (TK, D)   b/g/be: (1, D)
    # o_ref: (TM, D)   acc_ref: (TM, D) f32 scratch
    k = pl.program_id(1)

    # Init accumulator with residual + bias.
    # TODO(synk): training-mode dropout (stateful PRNG mask) not implemented;
    # this is the inference-mode identity.
    @pl.when(k == 0)
    def _():
        acc_ref[...] = (x_ref[...].astype(jnp.float32)
                        + b_ref[...].astype(jnp.float32))

    # Sublayer: Linear(dim, dim) on the MXU (native dtype in, f32 accumulate).
    if nk == 1:
        lhs = x_ref[...]
    else:
        start = pl.multiple_of(k * tk, 128)
        lhs = x_ref[:, pl.ds(start, tk)]
    acc_ref[...] += jnp.dot(lhs, w_ref[...],
                            preferred_element_type=jnp.float32)

    # LayerNorm epilogue on the last K step (centered variance, matches
    # PyTorch; avoids E[x^2]-mean^2 cancellation).
    @pl.when(k == nk - 1)
    def _():
        s = acc_ref[...]
        inv_d = jnp.float32(1.0 / s.shape[-1])
        mean = jnp.sum(s, axis=-1, keepdims=True) * inv_d
        c = s - mean
        var = jnp.sum(c * c, axis=-1, keepdims=True) * inv_d
        rstd = jax.lax.rsqrt(var + EPS)
        y = c * (rstd * g_ref[...].astype(jnp.float32)) \
            + be_ref[...].astype(jnp.float32)
        o_ref[...] = y.astype(o_ref.dtype)


def _round_up(x, m):
    return ((x + m - 1) // m) * m


def _pick_row_tile(rows, D, dtype_bytes, row_align):
    # Stream ~4 MiB of x per grid step (x + out together ~8 MiB of traffic).
    target = (4 << 20) // max(D * dtype_bytes, 1)
    tm = max(512, min(4096, target))
    tm = min(tm, _round_up(rows, row_align))
    # Keep grid >= 2 along the parallel row axis (v7x: 2 TensorCores).
    if rows > row_align:
        tm = min(tm, _round_up(pl.cdiv(rows, 2), row_align))
    tm = max(row_align, (tm // row_align) * row_align)
    return tm


def _pick_k_tile(D, dtype_bytes, budget=8 << 20):
    # Keep the full (D, D) weight block resident unless it would blow the VMEM
    # budget (v7x has only 64 MiB total); then K-tile at a 128-aligned size.
    if D * D * dtype_bytes <= budget or D % 128 != 0:
        return D
    tk = max(128, ((budget // (D * dtype_bytes)) // 128) * 128)
    while tk > 128 and D % tk != 0:
        tk -= 128
    return tk


def sublayer_wrapper(x, w, b, gamma, beta):
    """x: [B, S, D]; w: [D, D] (applied as x @ w); b/gamma/beta: [D]."""
    B, S, D = x.shape
    rows = B * S
    dtype_bytes = jnp.dtype(x.dtype).itemsize
    row_align = 8 if dtype_bytes >= 4 else (16 if dtype_bytes == 2 else 32)
    w_bytes = jnp.dtype(w.dtype).itemsize

    x2d = x.reshape(rows, D)
    b2d = b.reshape(1, D)
    g2d = gamma.reshape(1, D)
    be2d = beta.reshape(1, D)

    tm = _pick_row_tile(rows, D, dtype_bytes, row_align)
    tk = _pick_k_tile(D, w_bytes)
    nk = D // tk
    grid = (pl.cdiv(rows, tm), nk)

    # Scoped-VMEM estimate: double-buffered x and out, weight buffers, f32
    # accumulator, tiny constants.  Only raise the limit when we actually need
    # more than the conservative default (v5e: 16 MiB).
    w_bufs = 1 if nk == 1 else 2
    est = (2 * tm * D * dtype_bytes) * 2 \
        + w_bufs * tk * D * w_bytes \
        + tm * D * 4 \
        + 8 * D * 4
    vmem_limit = None
    if est > (12 << 20):
        vmem_limit = int(min(est * 1.25 + (2 << 20), 96 << 20))

    kernel = functools.partial(_sublayer_kernel, nk=nk, tk=tk)

    def call(single_buffer_consts):
        const_kw = (dict(pipeline_mode=pl.Buffered(1))
                    if single_buffer_consts else {})
        # Weight is grid-invariant only when not K-tiled.
        w_kw = const_kw if nk == 1 else {}
        in_specs = [
            pl.BlockSpec((tm, D), lambda i, k: (i, 0)),           # x rows
            pl.BlockSpec((tk, D), lambda i, k: (k, 0), **w_kw),   # weight
            pl.BlockSpec((1, D), lambda i, k: (0, 0), **const_kw),  # bias
            pl.BlockSpec((1, D), lambda i, k: (0, 0), **const_kw),  # gamma
            pl.BlockSpec((1, D), lambda i, k: (0, 0), **const_kw),  # beta
        ]
        return pl.pallas_call(
            kernel,
            out_shape=jax.ShapeDtypeStruct((rows, D), x.dtype),
            grid_spec=pltpu.PrefetchScalarGridSpec(
                num_scalar_prefetch=0,
                grid=grid,
                in_specs=in_specs,
                out_specs=pl.BlockSpec((tm, D), lambda i, k: (i, 0)),
                scratch_shapes=[pltpu.VMEM((tm, D), jnp.float32)],
            ),
            compiler_params=pltpu.CompilerParams(
                dimension_semantics=("parallel", "arbitrary"),
                vmem_limit_bytes=vmem_limit,
            ),
        )(x2d, w, b2d, g2d, be2d)

    try:
        out2d = call(True)
    except Exception:
        # Some jax versions reject Buffered(1); fall back to default buffering.
        out2d = call(False)

    return out2d.reshape(B, S, D)


def reference(x, w, b, gamma, beta):
    h = jnp.einsum("bsd,de->bse", x, w) + b
    s = x + h
    mean = jnp.mean(s, axis=-1, keepdims=True)
    var = jnp.mean((s - mean) ** 2, axis=-1, keepdims=True)
    return (s - mean) / jnp.sqrt(var + EPS) * gamma + beta


if __name__ == "__main__":
    # rows = B*S = 18: deliberately NOT a tile multiple, exercising the ragged
    # last block (no host-side pad/slice anymore).
    B, S, D = 2, 9, 128

    key = jax.random.PRNGKey(0)
    kx, kw, kb = jax.random.split(key, 3)

    x = jax.random.normal(kx, (B, S, D), dtype=jnp.float32)
    # Deterministic "Linear(dim, dim)" parameters (synthetic init).
    w = jax.random.normal(kw, (D, D), dtype=jnp.float32) * (D ** -0.5)
    b = jax.random.normal(kb, (D,), dtype=jnp.float32) * 0.01
    # LayerNorm affine params (PyTorch default init: ones / zeros).
    gamma = jnp.ones((D,), dtype=jnp.float32)
    beta = jnp.zeros((D,), dtype=jnp.float32)

    # f32 run (tight tolerance).
    out = jax.block_until_ready(sublayer_wrapper(x, w, b, gamma, beta))
    ref = reference(x, w, b, gamma, beta)
    assert out.shape == (B, S, D)
    assert jnp.allclose(out, ref, atol=5e-4, rtol=5e-4), "f32 mismatch"

    # bf16 I/O run (bandwidth-bound regime recommendation): same kernel, bf16
    # x/w streamed, f32 accumulate + f32 LayerNorm inside.
    xb = x.astype(jnp.bfloat16)
    wb = w.astype(jnp.bfloat16)
    out_bf = jax.block_until_ready(sublayer_wrapper(xb, wb, b, gamma, beta))
    ref_bf = reference(xb.astype(jnp.float32), wb.astype(jnp.float32),
                       b, gamma, beta)
    assert out_bf.dtype == jnp.bfloat16
    assert jnp.allclose(out_bf.astype(jnp.float32), ref_bf,
                        atol=5e-2, rtol=5e-2), "bf16 mismatch"

    print("KERNEL_OK")
</pallas_src>

<mosaic_0001>
module attributes {stable_mosaic.version = 11 : i64} {
  func.func @_sublayer_kernel(%arg0: i32, %arg1: i32, %arg2: memref<16x128xf32, #tpu.memory_space<vmem>>, %arg3: memref<128x128xf32, #tpu.memory_space<vmem>>, %arg4: memref<1x128xf32, #tpu.memory_space<vmem>>, %arg5: memref<1x128xf32, #tpu.memory_space<vmem>>, %arg6: memref<1x128xf32, #tpu.memory_space<vmem>>, %arg7: memref<16x128xf32, #tpu.memory_space<vmem>>, %arg8: memref<16x128xf32, #tpu.memory_space<vmem>>) attributes {dimension_semantics = [#tpu.dimension_semantics<parallel>, #tpu.dimension_semantics<arbitrary>], iteration_bounds = array<i64: 2, 1>, scalar_prefetch = 0 : i64, scratch_operands = 1 : i64, tpu.core_type = #tpu.core_type<tc>, window_params = [{transform_indices = @transform_0, window_bounds = array<i64: 16, 128>}, {pipeline_mode = #tpu.pipeline_mode<synchronous>, transform_indices = @transform_1, window_bounds = array<i64: 128, 128>}, {pipeline_mode = #tpu.pipeline_mode<synchronous>, transform_indices = @transform_2, window_bounds = array<i64: 1, 128>}, {pipeline_mode = #tpu.pipeline_mode<synchronous>, transform_indices = @transform_3, window_bounds = array<i64: 1, 128>}, {pipeline_mode = #tpu.pipeline_mode<synchronous>, transform_indices = @transform_4, window_bounds = array<i64: 1, 128>}, {transform_indices = @transform_5, window_bounds = array<i64: 16, 128>}]} {
    %c0_i32 = arith.constant 0 : i32
    %0 = arith.cmpi eq, %arg1, %c0_i32 : i32
    %1 = arith.extui %0 : i1 to i32
    %c0_i32_0 = arith.constant 0 : i32
    %2 = arith.cmpi ne, %1, %c0_i32_0 : i32
    scf.if %2 {
      %c0_10 = arith.constant 0 : index
      %c0_11 = arith.constant 0 : index
      %12 = vector.load %arg2[%c0_10, %c0_11] : memref<16x128xf32, #tpu.memory_space<vmem>>, vector<16x128xf32>
      %c0_12 = arith.constant 0 : index
      %c0_13 = arith.constant 0 : index
      %13 = vector.load %arg4[%c0_12, %c0_13] : memref<1x128xf32, #tpu.memory_space<vmem>>, vector<1x128xf32>
      %14 = vector.broadcast %13 : vector<1x128xf32> to vector<16x128xf32>
      %15 = arith.addf %12, %14 : vector<16x128xf32>
      %c0_14 = arith.constant 0 : index
      %c0_15 = arith.constant 0 : index
      %16 = vector.load %arg8[%c0_14, %c0_15] : memref<16x128xf32, #tpu.memory_space<vmem>>, vector<16x128xf32>
      tpu.vector_store %arg8[%c0_14, %c0_15], %15 {strides = array<i32>} : memref<16x128xf32, #tpu.memory_space<vmem>>, vector<16x128xf32>,
    } else {
    }
    %c0 = arith.constant 0 : index
    %c0_1 = arith.constant 0 : index
    %3 = vector.load %arg2[%c0, %c0_1] : memref<16x128xf32, #tpu.memory_space<vmem>>, vector<16x128xf32>
    %c0_2 = arith.constant 0 : index
    %c0_3 = arith.constant 0 : index
    %4 = vector.load %arg8[%c0_2, %c0_3] : memref<16x128xf32, #tpu.memory_space<vmem>>, vector<16x128xf32>
    %c0_4 = arith.constant 0 : index
    %c0_5 = arith.constant 0 : index
    %5 = vector.load %arg3[%c0_4, %c0_5] : memref<128x128xf32, #tpu.memory_space<vmem>>, vector<128x128xf32>
    %cst = arith.constant dense<0.000000e+00> : vector<16x128xf32>
    %6 = tpu.matmul %3, %5, %cst {dimension_numbers = #tpu.dot_dimension_numbers<[1], [0], [0], [1], [0, 0, 1, 1], [], []>} : vector<16x128xf32>, vector<128x128xf32>, vector<16x128xf32> -> vector<16x128xf32>
    %7 = arith.addf %4, %6 : vector<16x128xf32>
    %c0_6 = arith.constant 0 : index
    %c0_7 = arith.constant 0 : index
    %8 = vector.load %arg8[%c0_6, %c0_7] : memref<16x128xf32, #tpu.memory_space<vmem>>, vector<16x128xf32>
    tpu.vector_store %arg8[%c0_6, %c0_7], %7 {strides = array<i32>} : memref<16x128xf32, #tpu.memory_space<vmem>>, vector<16x128xf32>,
    %c0_i32_8 = arith.constant 0 : i32
    %9 = arith.cmpi eq, %arg1, %c0_i32_8 : i32
    %10 = arith.extui %9 : i1 to i32
    %c0_i32_9 = arith.constant 0 : i32
    %11 = arith.cmpi ne, %10, %c0_i32_9 : i32
    scf.if %11 {
      %c0_10 = arith.constant 0 : index
      %c0_11 = arith.constant 0 : index
      %12 = vector.load %arg8[%c0_10, %c0_11] : memref<16x128xf32, #tpu.memory_space<vmem>>, vector<16x128xf32>
      %cst_12 = arith.constant dense<0.000000e+00> : vector<16xf32>
      %13 = vector.multi_reduction <add>, %12, %cst_12 [1] : vector<16x128xf32> to vector<16xf32>
      %14 = vector.shape_cast %13 : vector<16xf32> to vector<16x1xf32>
      %cst_13 = arith.constant 7.812500e-03 : f32
      %15 = vector.broadcast %cst_13 : f32 to vector<16x1xf32>
      %16 = arith.mulf %14, %15 : vector<16x1xf32>
      %17 = vector.broadcast %16 : vector<16x1xf32> to vector<16x128xf32>
      %18 = arith.subf %12, %17 : vector<16x128xf32>
      %19 = arith.mulf %18, %18 : vector<16x128xf32>
      %cst_14 = arith.constant dense<0.000000e+00> : vector<16xf32>
      %20 = vector.multi_reduction <add>, %19, %cst_14 [1] : vector<16x128xf32> to vector<16xf32>
      %21 = vector.shape_cast %20 : vector<16xf32> to vector<16x1xf32>
      %cst_15 = arith.constant 7.812500e-03 : f32
      %22 = vector.broadcast %cst_15 : f32 to vector<16x1xf32>
      %23 = arith.mulf %21, %22 : vector<16x1xf32>
      %cst_16 = arith.constant 9.99999974E-6 : f32
      %24 = vector.broadcast %cst_16 : f32 to vector<16x1xf32>
      %25 = arith.addf %23, %24 : vector<16x1xf32>
      %26 = math.rsqrt %25 : vector<16x1xf32>
      %c0_17 = arith.constant 0 : index
      %c0_18 = arith.constant 0 : index
      %27 = vector.load %arg5[%c0_17, %c0_18] : memref<1x128xf32, #tpu.memory_space<vmem>>, vector<1x128xf32>
      %28 = vector.broadcast %26 : vector<16x1xf32> to vector<16x128xf32>
      %29 = vector.broadcast %27 : vector<1x128xf32> to vector<16x128xf32>
      %30 = arith.mulf %28, %29 : vector<16x128xf32>
      %31 = arith.mulf %18, %30 : vector<16x128xf32>
      %c0_19 = arith.constant 0 : index
      %c0_20 = arith.constant 0 : index
      %32 = vector.load %arg6[%c0_19, %c0_20] : memref<1x128xf32, #tpu.memory_space<vmem>>, vector<1x128xf32>
      %33 = vector.broadcast %32 : vector<1x128xf32> to vector<16x128xf32>
      %34 = arith.addf %31, %33 : vector<16x128xf32>
      %c0_21 = arith.constant 0 : index
      %c0_22 = arith.constant 0 : index
      %35 = vector.load %arg7[%c0_21, %c0_22] : memref<16x128xf32, #tpu.memory_space<vmem>>, vector<16x128xf32>
      tpu.vector_store %arg7[%c0_21, %c0_22], %34 {strides = array<i32>} : memref<16x128xf32, #tpu.memory_space<vmem>>, vector<16x128xf32>,
    } else {
    }
    return
  }
  func.func @transform_0(%arg0: i32, %arg1: i32) -> (i32, i32) {
    %c0_i32 = arith.constant 0 : i32
    %c0_i32_0 = arith.constant 0 : i32
    return %arg0, %c0_i32 : i32, i32
  }
  func.func @transform_1(%arg0: i32, %arg1: i32) -> (i32, i32) {
    %c0_i32 = arith.constant 0 : i32
    %c0_i32_0 = arith.constant 0 : i32
    return %arg1, %c0_i32 : i32, i32
  }
  func.func @transform_2(%arg0: i32, %arg1: i32) -> (i32, i32) {
    %c0_i32 = arith.constant 0 : i32
    %c0_i32_0 = arith.constant 0 : i32
    %c0_i32_1 = arith.constant 0 : i32
    return %c0_i32, %c0_i32_0 : i32, i32
  }
  func.func @transform_3(%arg0: i32, %arg1: i32) -> (i32, i32) {
    %c0_i32 = arith.constant 0 : i32
    %c0_i32_0 = arith.constant 0 : i32
    %c0_i32_1 = arith.constant 0 : i32
    return %c0_i32, %c0_i32_0 : i32, i32
  }
  func.func @transform_4(%arg0: i32, %arg1: i32) -> (i32, i32) {
    %c0_i32 = arith.constant 0 : i32
    %c0_i32_0 = arith.constant 0 : i32
    %c0_i32_1 = arith.constant 0 : i32
    return %c0_i32, %c0_i32_0 : i32, i32
  }
  func.func @transform_5(%arg0: i32, %arg1: i32) -> (i32, i32) {
    %c0_i32 = arith.constant 0 : i32
    %c0_i32_0 = arith.constant 0 : i32
    return %arg0, %c0_i32 : i32, i32
  }
}

module attributes {stable_mosaic.version = 11 : i64} {
  func.func @_sublayer_kernel(%arg0: i32, %arg1: i32, %arg2: memref<16x128xf32, #tpu.memory_space<vmem>>, %arg3: memref<128x128xf32, #tpu.memory_space<vmem>>, %arg4: memref<1x128xf32, #tpu.memory_space<vmem>>, %arg5: memref<1x128xf32, #tpu.memory_space<vmem>>, %arg6: memref<1x128xf32, #tpu.memory_space<vmem>>, %arg7: memref<16x128xf32, #tpu.memory_space<vmem>>, %arg8: memref<16x128xf32, #tpu.memory_space<vmem>>) attributes {dimension_semantics = [#tpu.dimension_semantics<parallel>, #tpu.dimension_semantics<arbitrary>], iteration_bounds = array<i64: 2, 1>, scalar_prefetch = 0 : i64, scratch_operands = 1 : i64, tpu.core_type = #tpu.core_type<tc>, window_params = [{transform_indices = @transform_0, window_bounds = array<i64: 16, 128>}, {transform_indices = @transform_1, window_bounds = array<i64: 128, 128>}, {pipeline_mode = #tpu.pipeline_mode<synchronous>, transform_indices = @transform_2, window_bounds = array<i64: 1, 128>}, {pipeline_mode = #tpu.pipeline_mode<synchronous>, transform_indices = @transform_3, window_bounds = array<i64: 1, 128>}, {pipeline_mode = #tpu.pipeline_mode<synchronous>, transform_indices = @transform_4, window_bounds = array<i64: 1, 128>}, {transform_indices = @transform_5, window_bounds = array<i64: 16, 128>}]} {
    %c0_i32 = arith.constant 0 : i32
    %0 = arith.cmpi eq, %arg1, %c0_i32 : i32
    %1 = arith.extui %0 : i1 to i32
    %c0_i32_0 = arith.constant 0 : i32
    %2 = arith.cmpi ne, %1, %c0_i32_0 : i32
    scf.if %2 {
      %c0_10 = arith.constant 0 : index
      %c0_11 = arith.constant 0 : index
      %12 = vector.load %arg2[%c0_10, %c0_11] : memref<16x128xf32, #tpu.memory_space<vmem>>, vector<16x128xf32>
      %c0_12 = arith.constant 0 : index
      %c0_13 = arith.constant 0 : index
      %13 = vector.load %arg4[%c0_12, %c0_13] : memref<1x128xf32, #tpu.memory_space<vmem>>, vector<1x128xf32>
      %14 = vector.broadcast %13 : vector<1x128xf32> to vector<16x128xf32>
      %15 = arith.addf %12, %14 : vector<16x128xf32>
      %c0_14 = arith.constant 0 : index
      %c0_15 = arith.constant 0 : index
      %16 = vector.load %arg8[%c0_14, %c0_15] : memref<16x128xf32, #tpu.memory_space<vmem>>, vector<16x128xf32>
      tpu.vector_store %arg8[%c0_14, %c0_15], %15 {strides = array<i32>} : memref<16x128xf32, #tpu.memory_space<vmem>>, vector<16x128xf32>,
    } else {
    }
    %c0 = arith.constant 0 : index
    %c0_1 = arith.constant 0 : index
    %3 = vector.load %arg2[%c0, %c0_1] : memref<16x128xf32, #tpu.memory_space<vmem>>, vector<16x128xf32>
    %c0_2 = arith.constant 0 : index
    %c0_3 = arith.constant 0 : index
    %4 = vector.load %arg8[%c0_2, %c0_3] : memref<16x128xf32, #tpu.memory_space<vmem>>, vector<16x128xf32>
    %c0_4 = arith.constant 0 : index
    %c0_5 = arith.constant 0 : index
    %5 = vector.load %arg3[%c0_4, %c0_5] : memref<128x128xf32, #tpu.memory_space<vmem>>, vector<128x128xf32>
    %cst = arith.constant dense<0.000000e+00> : vector<16x128xf32>
    %6 = tpu.matmul %3, %5, %cst {dimension_numbers = #tpu.dot_dimension_numbers<[1], [0], [0], [1], [0, 0, 1, 1], [], []>} : vector<16x128xf32>, vector<128x128xf32>, vector<16x128xf32> -> vector<16x128xf32>
    %7 = arith.addf %4, %6 : vector<16x128xf32>
    %c0_6 = arith.constant 0 : index
    %c0_7 = arith.constant 0 : index
    %8 = vector.load %arg8[%c0_6, %c0_7] : memref<16x128xf32, #tpu.memory_space<vmem>>, vector<16x128xf32>
    tpu.vector_store %arg8[%c0_6, %c0_7], %7 {strides = array<i32>} : memref<16x128xf32, #tpu.memory_space<vmem>>, vector<16x128xf32>,
    %c0_i32_8 = arith.constant 0 : i32
    %9 = arith.cmpi eq, %arg1, %c0_i32_8 : i32
    %10 = arith.extui %9 : i1 to i32
    %c0_i32_9 = arith.constant 0 : i32
    %11 = arith.cmpi ne, %10, %c0_i32_9 : i32
    scf.if %11 {
      %c0_10 = arith.constant 0 : index
      %c0_11 = arith.constant 0 : index
      %12 = vector.load %arg8[%c0_10, %c0_11] : memref<16x128xf32, #tpu.memory_space<vmem>>, vector<16x128xf32>
      %cst_12 = arith.constant dense<0.000000e+00> : vector<16xf32>
      %13 = vector.multi_reduction <add>, %12, %cst_12 [1] : vector<16x128xf32> to vector<16xf32>
      %14 = vector.shape_cast %13 : vector<16xf32> to vector<16x1xf32>
      %cst_13 = arith.constant 7.812500e-03 : f32
      %15 = vector.broadcast %cst_13 : f32 to vector<16x1xf32>
      %16 = arith.mulf %14, %15 : vector<16x1xf32>
      %17 = vector.broadcast %16 : vector<16x1xf32> to vector<16x128xf32>
      %18 = arith.subf %12, %17 : vector<16x128xf32>
      %19 = arith.mulf %18, %18 : vector<16x128xf32>
      %cst_14 = arith.constant dense<0.000000e+00> : vector<16xf32>
      %20 = vector.multi_reduction <add>, %19, %cst_14 [1] : vector<16x128xf32> to vector<16xf32>
      %21 = vector.shape_cast %20 : vector<16xf32> to vector<16x1xf32>
      %cst_15 = arith.constant 7.812500e-03 : f32
      %22 = vector.broadcast %cst_15 : f32 to vector<16x1xf32>
      %23 = arith.mulf %21, %22 : vector<16x1xf32>
      %cst_16 = arith.constant 9.99999974E-6 : f32
      %24 = vector.broadcast %cst_16 : f32 to vector<16x1xf32>
      %25 = arith.addf %23, %24 : vector<16x1xf32>
      %26 = math.rsqrt %25 : vector<16x1xf32>
      %c0_17 = arith.constant 0 : index
      %c0_18 = arith.constant 0 : index
      %27 = vector.load %arg5[%c0_17, %c0_18] : memref<1x128xf32, #tpu.memory_space<vmem>>, vector<1x128xf32>
      %28 = vector.broadcast %26 : vector<16x1xf32> to vector<16x128xf32>
      %29 = vector.broadcast %27 : vector<1x128xf32> to vector<16x128xf32>
      %30 = arith.mulf %28, %29 : vector<16x128xf32>
      %31 = arith.mulf %18, %30 : vector<16x128xf32>
      %c0_19 = arith.constant 0 : index
      %c0_20 = arith.constant 0 : index
      %32 = vector.load %arg6[%c0_19, %c0_20] : memref<1x128xf32, #tpu.memory_space<vmem>>, vector<1x128xf32>
      %33 = vector.broadcast %32 : vector<1x128xf32> to vector<16x128xf32>
      %34 = arith.addf %31, %33 : vector<16x128xf32>
      %c0_21 = arith.constant 0 : index
      %c0_22 = arith.constant 0 : index
      %35 = vector.load %arg7[%c0_21, %c0_22] : memref<16x128xf32, #tpu.memory_space<vmem>>, vector<16x128xf32>
      tpu.vector_store %arg7[%c0_21, %c0_22], %34 {strides = array<i32>} : memref<16x128xf32, #tpu.memory_space<vmem>>, vector<16x128xf32>,
    } else {
    }
    return
  }
  func.func @transform_0(%arg0: i32, %arg1: i32) -> (i32, i32) {
    %c0_i32 = arith.constant 0 : i32
    %c0_i32_0 = arith.constant 0 : i32
    return %arg0, %c0_i32 : i32, i32
  }
  func.func @transform_1(%arg0: i32, %arg1: i32) -> (i32, i32) {
    %c0_i32 = arith.constant 0 : i32
    %c0_i32_0 = arith.constant 0 : i32
    return %arg1, %c0_i32 : i32, i32
  }
  func.func @transform_2(%arg0: i32, %arg1: i32) -> (i32, i32) {
    %c0_i32 = arith.constant 0 : i32
    %c0_i32_0 = arith.constant 0 : i32
    %c0_i32_1 = arith.constant 0 : i32
    return %c0_i32, %c0_i32_0 : i32, i32
  }
  func.func @transform_3(%arg0: i32, %arg1: i32) -> (i32, i32) {
    %c0_i32 = arith.constant 0 : i32
    %c0_i32_0 = arith.constant 0 : i32
    %c0_i32_1 = arith.constant 0 : i32
    return %c0_i32, %c0_i32_0 : i32, i32
  }
  func.func @transform_4(%arg0: i32, %arg1: i32) -> (i32, i32) {
    %c0_i32 = arith.constant 0 : i32
    %c0_i32_0 = arith.constant 0 : i32
    %c0_i32_1 = arith.constant 0 : i32
    return %c0_i32, %c0_i32_0 : i32, i32
  }
  func.func @transform_5(%arg0: i32, %arg1: i32) -> (i32, i32) {
    %c0_i32 = arith.constant 0 : i32
    %c0_i32_0 = arith.constant 0 : i32
    return %arg0, %c0_i32 : i32, i32
  }
}

</mosaic_0001>

<llo_original>
// kernel: tpu_custom_call.1
$region0: #{tpu_custom_call.1}
  #allocation0 [shape = 'u32[]', space=smem, size = 0x4, offset = 0x4, fixed_abs, tag = 'smem constant byte address 0x4 - core index']
  #allocation1 [shape = 'u32[144,128]{1,0:T(1,128)}', space=vmem, size = 0x12000, scoped, tag = 'internal scratch']
  #allocation2 [shape = 'f32[16,128]{1,0:T(8,128)}', space=vmem, size = 0x2000, scoped, tag = 'scratch operand']
  %s0 = inlined_call_operand.hbm [shape: f32[18,128], index: 0, kind: input, shape index: {}]
  %s1 = inlined_call_operand.hbm [shape: f32[128,128], index: 1, kind: input, shape index: {}]
  %s2 = inlined_call_operand.vmem [shape: f32[1,128], index: 2, kind: input, shape index: {}]
  %s3 = inlined_call_operand.vmem [shape: f32[1,128], index: 3, kind: input, shape index: {}]
  %s4 = inlined_call_operand.vmem [shape: f32[1,128], index: 4, kind: input, shape index: {}]
  %s5 = inlined_call_operand.hbm [shape: f32[18,128], index: 5, kind: output, shape index: {}]
  %s6 = sld [smem:[#allocation0]]
  $region69: #{tpu_custom_call.1} parent=0
    _
  %s8 = ssub.s32 1, %s6
  %s9 = scalar_select 0, %s8, %s6
  $region1: #{tpu_custom_call.1} parent=0
    #allocation3 [shape = 'u8[16384]{0}', space=vmem, size = 0x4000, scoped, tag = 'input window, operand 0']
    #allocation4 [shape = 's32[2]{0}', space=sflag, size = 0x8, scoped, tag = 'scoped memory for tpu_custom_call.1']
    #allocation5 [shape = 's32[2]{0}', space=sflag, size = 0x8, scoped, tag = 'scoped memory for tpu_custom_call.1']
    #allocation6 [shape = 'u8[65536]{0}', space=vmem, size = 0x10000, scoped, tag = 'input window, operand 1, single buffered']
    #allocation7 [shape = 's32[1]{0}', space=sflag, size = 0x4, scoped, tag = 'scoped memory for tpu_custom_call.1']
    #allocation8 [shape = 'u8[16384]{0}', space=vmem, size = 0x4000, scoped, tag = 'output window, operand 0']
    %10 = vsyncpa [#allocation4], 0
    %s11 = scalar_lea.sflag [#allocation4], 1
    %12 = vsyncpa %s11, 0
    %13 = vsyncpa [#allocation7], 0
    %14 = vsyncpa [#allocation5], 0
    %s15 = scalar_lea.sflag [#allocation5], 1
    %16 = vsyncpa %s15, 0
    loop: start=0, step=1, limit=4
    $region2: #{tpu_custom_call.1} parent=1 // loop_pre_header
      _
    $region3: #{tpu_custom_call.1} parent=1 // loop_header
      %s18 = sphi 0, %s22
      %p19 = scmp.ge.s32.totalorder %s18, 4
      %s25 = sphi 0, %s37
      %s26 = sphi 0, %s33
      %s27 = sphi 0, %s25
      %s28 = sphi 0, %s26
      %s29 = sphi 0, %s27
      %s30 = sphi 0, %s28
      %s40 = sphi 0, %s42
      %s43 = sphi 0, %s40
      %s44 = sphi 0, %s43
      %s60 = sphi 0, %s44
      %s66 = sphi 0, %s68
      %s69 = sphi 0, %s66
      %s70 = sphi 0, %s69
      %s86 = sphi 0, %s70
      %s90 = sphi 0, %s90
      %s92 = sphi 0, %s90
      %s93 = sphi 0, %s92
      %s107 = sphi 0, %s93
      %s111 = sphi 0, %s111
      %s113 = sphi 0, %s111
      %s114 = sphi 0, %s113
      %s128 = sphi 0, %s114
      %s132 = sphi 0, %s132
      %s134 = sphi 0, %s132
      %s135 = sphi 0, %s134
      %s149 = sphi 0, %s135
      %s155 = sphi 0, %s157
      %s158 = sphi 0, %s155
      %s159 = sphi 0, %s158
      %s175 = sphi 0, %s159
    $region4: #{tpu_custom_call.1} parent=1 // loop_header_branch
      %21 = sbr.rel (%p19) target = $region8
    $region5: #{tpu_custom_call.1} parent=1 // loop_body
      %s23 = ssub.s32 %s18, 1
      %s24 = ssub.s32 %s18, 2
      %s31 = sadd.s32 1, %s26
      %p32 = scmp.ge.s32.totalorder %s31, 1
      %s33 = scalar_select %p32, 0, %s31
      %s34 = sadd.s32 1, %s25
      %s35 = scalar_select %p32, %s34, %s25
      %p36 = scmp.ge.s32.totalorder %s35, 2
      %s37 = scalar_select %p36, 0, %s35
      %s38 = ssub.s32 %s25, %s37
      %p39 = scmp.eq.s32.totalorder %s38, 0
      %s41 = sadd.s32 %s40, 1
      %s42 = scalar_select %p39, %s40, %s41
      %p45 = pneg %p39
      %p46 = scmp.eq.s32.totalorder %s18, 1
      %p47 = por %p45, %p46
      %p48 = scmp.ne.s32.totalorder %s40, %s43
      %p49 = scmp.eq.s32.totalorder %s18, 0
      %p50 = por %p48, %p49
      %p51 = scmp.ne.s32.totalorder %s40, %s43
      %p52 = scmp.eq.s32.totalorder %s23, 1
      %p53 = por %p51, %p52
      %p54 = scmp.ne.s32.totalorder %s43, %s44
      %p55 = scmp.eq.s32.totalorder %s23, 0
      %p56 = por %p54, %p55
      %p57 = scmp.ne.s32.totalorder %s43, %s44
      %p58 = scmp.eq.s32.totalorder %s24, 1
      %p59 = por %p57, %p58
      %p61 = scmp.ne.s32.totalorder %s44, %s60
      %p62 = scmp.eq.s32.totalorder %s24, 0
      %p63 = por %p61, %p62
      %s64 = ssub.s32 %s26, %s33
      %p65 = scmp.eq.s32.totalorder %s64, 0
      %s67 = sadd.s32 %s66, 1
      %s68 = scalar_select %p65, %s66, %s67
      %p71 = pneg %p65
      %p72 = scmp.eq.s32.totalorder %s18, 1
      %p73 = por %p71, %p72
      %p74 = scmp.ne.s32.totalorder %s66, %s69
      %p75 = scmp.eq.s32.totalorder %s18, 0
      %p76 = por %p74, %p75
      %p77 = scmp.ne.s32.totalorder %s66, %s69
      %p78 = scmp.eq.s32.totalorder %s23, 1
      %p79 = por %p77, %p78
      %p80 = scmp.ne.s32.totalorder %s69, %s70
      %p81 = scmp.eq.s32.totalorder %s23, 0
      %p82 = por %p80, %p81
      %p83 = scmp.ne.s32.totalorder %s69, %s70
      %p84 = scmp.eq.s32.totalorder %s24, 1
      %p85 = por %p83, %p84
      %p87 = scmp.ne.s32.totalorder %s70, %s86
      %p88 = scmp.eq.s32.totalorder %s24, 0
      %p89 = por %p87, %p88
      %s91 = sadd.s32 %s90, 1
      %p94 = scmp.eq.s32.totalorder %s18, 1
      %p95 = scmp.ne.s32.totalorder %s90, %s92
      %p96 = scmp.eq.s32.totalorder %s18, 0
      %p97 = por %p95, %p96
      %p98 = scmp.ne.s32.totalorder %s90, %s92
      %p99 = scmp.eq.s32.totalorder %s23, 1
      %p100 = por %p98, %p99
      %p101 = scmp.ne.s32.totalorder %s92, %s93
      %p102 = scmp.eq.s32.totalorder %s23, 0
      %p103 = por %p101, %p102
      %p104 = scmp.ne.s32.totalorder %s92, %s93
      %p105 = scmp.eq.s32.totalorder %s24, 1
      %p106 = por %p104, %p105
      %p108 = scmp.ne.s32.totalorder %s93, %s107
      %p109 = scmp.eq.s32.totalorder %s24, 0
      %p110 = por %p108, %p109
      %s112 = sadd.s32 %s111, 1
      %p115 = scmp.eq.s32.totalorder %s18, 1
      %p116 = scmp.ne.s32.totalorder %s111, %s113
      %p117 = scmp.eq.s32.totalorder %s18, 0
      %p118 = por %p116, %p117
      %p119 = scmp.ne.s32.totalorder %s111, %s113
      %p120 = scmp.eq.s32.totalorder %s23, 1
      %p121 = por %p119, %p120
      %p122 = scmp.ne.s32.totalorder %s113, %s114
      %p123 = scmp.eq.s32.totalorder %s23, 0
      %p124 = por %p122, %p123
      %p125 = scmp.ne.s32.totalorder %s113, %s114
      %p126 = scmp.eq.s32.totalorder %s24, 1
      %p127 = por %p125, %p126
      %p129 = scmp.ne.s32.totalorder %s114, %s128
      %p130 = scmp.eq.s32.totalorder %s24, 0
      %p131 = por %p129, %p130
      %s133 = sadd.s32 %s132, 1
      %p136 = scmp.eq.s32.totalorder %s18, 1
      %p137 = scmp.ne.s32.totalorder %s132, %s134
      %p138 = scmp.eq.s32.totalorder %s18, 0
      %p139 = por %p137, %p138
      %p140 = scmp.ne.s32.totalorder %s132, %s134
      %p141 = scmp.eq.s32.totalorder %s23, 1
      %p142 = por %p140, %p141
      %p143 = scmp.ne.s32.totalorder %s134, %s135
      %p144 = scmp.eq.s32.totalorder %s23, 0
      %p145 = por %p143, %p144
      %p146 = scmp.ne.s32.totalorder %s134, %s135
      %p147 = scmp.eq.s32.totalorder %s24, 1
      %p148 = por %p146, %p147
      %p150 = scmp.ne.s32.totalorder %s135, %s149
      %p151 = scmp.eq.s32.totalorder %s24, 0
      %p152 = por %p150, %p151
      %s153 = ssub.s32 %s25, %s37
      %p154 = scmp.eq.s32.totalorder %s153, 0
      %s156 = sadd.s32 %s155, 1
      %s157 = scalar_select %p154, %s155, %s156
      %p160 = pneg %p154
      %p161 = scmp.eq.s32.totalorder %s18, 1
      %p162 = por %p160, %p161
      %p163 = scmp.ne.s32.totalorder %s155, %s158
      %p164 = scmp.eq.s32.totalorder %s18, 0
      %p165 = por %p163, %p164
      %p166 = scmp.ne.s32.totalorder %s155, %s158
      %p167 = scmp.eq.s32.totalorder %s23, 1
      %p168 = por %p166, %p167
      %p169 = scmp.ne.s32.totalorder %s158, %s159
      %p170 = scmp.eq.s32.totalorder %s23, 0
      %p171 = por %p169, %p170
      %p172 = scmp.ne.s32.totalorder %s158, %s159
      %p173 = scmp.eq.s32.totalorder %s24, 1
      %p174 = por %p172, %p173
      %p176 = scmp.ne.s32.totalorder %s159, %s175
      %p177 = scmp.eq.s32.totalorder %s24, 0
      %p178 = por %p176, %p177
      %p179 = scmp.le.s32.totalorder 1, %s18
      %p180 = scmp.lt.s32.totalorder %s18, 3
      %p181 = pnand %p179, %p180
      %p182 = pneg %p181
      // Predicated region
      $region9: #{tpu_custom_call.1} parent=5 // pred_check
        _
      $region10: #{tpu_custom_call.1} parent=5 // pred_check_branch
        %184 = sbr.rel (%p181) target = $region12
      $region11: #{tpu_custom_call.1} parent=5 // pred_region
        %s185 = ssub.s32 %s18, 1
        // Predicated region
        $region13: #{tpu_custom_call.1} parent=11 // pred_check
          %p186 = pneg %p82
        $region14: #{tpu_custom_call.1} parent=11 // pred_check_branch
          %188 = sbr.rel (%p186) target = $region16
        $region15: #{tpu_custom_call.1} parent=11 // pred_region
          %s189 = smul.u32 16, %s28
          %s191 = ssub.s32 2048, 2048
          %192 = vsyncadd [#allocation7], %s191
          %s193 = smul.addr %s189, 128
          %s194 = scalar_lea.hbm %s1, %s193
          %s195 = sshll.u32 [#allocation6], 4
          %s196 = int_to_ptr.vmem [resolvable:$true] %s195
          %201 = dma.hbm_to_vmem [thread:$0]  %s194, 2048, %s196, [#allocation7], 128, 128, 8
        $region16: #{tpu_custom_call.1} parent=11 // pred_fallthru
          _
        // Predicated region
        $region17: #{tpu_custom_call.1} parent=11 // pred_check
          %p202 = pneg %p103
        $region18: #{tpu_custom_call.1} parent=11 // pred_check_branch
          %204 = sbr.rel (%p202) target = $region20
        $region19: #{tpu_custom_call.1} parent=11 // pred_region
          _
        $region20: #{tpu_custom_call.1} parent=11 // pred_fallthru
          _
        // Predicated region
        $region21: #{tpu_custom_call.1} parent=11 // pred_check
          %p205 = pneg %p124
        $region22: #{tpu_custom_call.1} parent=11 // pred_check_branch
          %207 = sbr.rel (%p205) target = $region24
        $region23: #{tpu_custom_call.1} parent=11 // pred_region
          _
        $region24: #{tpu_custom_call.1} parent=11 // pred_fallthru
          _
        // Predicated region
        $region25: #{tpu_custom_call.1} parent=11 // pred_check
          %p208 = pneg %p145
        $region26: #{tpu_custom_call.1} parent=11 // pred_check_branch
          %210 = sbr.rel (%p208) target = $region28
        $region27: #{tpu_custom_call.1} parent=11 // pred_region
          _
        $region28: #{tpu_custom_call.1} parent=11 // pred_fallthru
          _
      $region12: #{tpu_custom_call.1} parent=5 // pred_fallthru
        _
      %p211 = scmp.lt.s32.totalorder %s18, 2
      // Predicated region
      $region29: #{tpu_custom_call.1} parent=5 // pred_check
        %p212 = pneg %p211
      $region30: #{tpu_custom_call.1} parent=5 // pred_check_branch
        %214 = sbr.rel (%p212) target = $region32
      $region31: #{tpu_custom_call.1} parent=5 // pred_region
        // Predicated region
        $region33: #{tpu_custom_call.1} parent=31 // pred_check
          %p215 = pneg %p50
        $region34: #{tpu_custom_call.1} parent=31 // pred_check_branch
          %217 = sbr.rel (%p215) target = $region36
        $region35: #{tpu_custom_call.1} parent=31 // pred_region
          %s218 = sand.u32 %s40, 1
          %s219 = scalar_lea.sflag [#allocation4], %s218
          %s220 = sand.u32 %s40, 1
          %s221 = smul.addr %s220, 16
          %s222 = scalar_lea.vmem [#allocation3], %s221
          %s223 = smul.u32 2, %s25
          %s224 = ssub.s32 3, %s223
          %p225 = scmp.lt.s32.totalorder %s224, 2
          %s226 = scalar_select %p225, %s224, 2
          %s227 = smul.u32 128, %s226
          %s229 = ssub.s32 256, %s227
          %230 = vsyncadd %s219, %s229
          %p231 = scmp.ne.s32.totalorder 0, %s227
          %s232 = smul.addr %s223, 128
          %s233 = scalar_lea.hbm %s0, %s232
          %s234 = smul.u32 8, %s226
          %s235 = sshll.u32 %s222, 4
          %s236 = int_to_ptr.vmem [resolvable:$true] %s235
          %s237 = sshll.u32 %s234, 4
          %241 = dma.hbm_to_vmem [thread:$0]  (%p231), %s233, %s237, %s236, %s219, 128, 128, 8
        $region36: #{tpu_custom_call.1} parent=31 // pred_fallthru
          _
      $region32: #{tpu_custom_call.1} parent=5 // pred_fallthru
        _
      %p242 = scmp.le.s32.totalorder 1, %s18
      %p243 = scmp.lt.s32.totalorder %s18, 3
      %p244 = pnand %p242, %p243
      %p245 = pneg %p244
      // Predicated region
      $region37: #{tpu_custom_call.1} parent=5 // pred_check
        _
      $region38: #{tpu_custom_call.1} parent=5 // pred_check_branch
        %247 = sbr.rel (%p244) target = $region40
      $region39: #{tpu_custom_call.1} parent=5 // pred_region
        %s248 = ssub.s32 %s18, 1
        %s249 = sand.u32 %s43, 1
        %s250 = scalar_lea.sflag [#allocation4], %s249
        %s251 = sand.u32 %s43, 1
        %s252 = smul.addr %s251, 16
        %s253 = scalar_lea.vmem [#allocation3], %s252
        // Predicated region
        $region41: #{tpu_custom_call.1} parent=39 // pred_check
          %p254 = pneg %p56
        $region42: #{tpu_custom_call.1} parent=39 // pred_check_branch
          %256 = sbr.rel (%p254) target = $region44
        $region43: #{tpu_custom_call.1} parent=39 // pred_region
          %257 = dma.done %s250, 256
        $region44: #{tpu_custom_call.1} parent=39 // pred_fallthru
          _
        // Predicated region
        $region45: #{tpu_custom_call.1} parent=39 // pred_check
          %p258 = pneg %p82
        $region46: #{tpu_custom_call.1} parent=39 // pred_check_branch
          %260 = sbr.rel (%p258) target = $region48
        $region47: #{tpu_custom_call.1} parent=39 // pred_region
          %261 = dma.done [#allocation7], 2048
        $region48: #{tpu_custom_call.1} parent=39 // pred_fallthru
          _
        %s262 = sand.u32 %s43, 1
        %s263 = scalar_lea.sflag [#allocation4], %s262
        %s264 = sand.u32 %s43, 1
        %s265 = smul.addr %s264, 16
        %s266 = scalar_lea.vmem [#allocation3], %s265
        %p267 = pneg %p56
        %p268 = pneg %p53
        %p269 = pneg %p82
        %p270 = pneg %p79
        %p271 = pneg %p103
        %p272 = pneg %p100
        %p273 = pneg %p124
        %p274 = pneg %p121
        %p275 = pneg %p145
        %p276 = pneg %p142
        %p277 = pneg %p171
        %p278 = pneg %p168
        %s279 = sand.u32 %s158, 1
        %s280 = scalar_lea.sflag [#allocation5], %s279
        %s281 = sand.u32 %s158, 1
        %s282 = smul.addr %s281, 16
        %s283 = scalar_lea.vmem [#allocation8], %s282
        %s284 = smul.u32 2, %s27
        %s285 = ssub.s32 3, %s284
        %p286 = scmp.lt.s32.totalorder %s285, 2
        %s287 = scalar_select %p286, %s285, 2
        %s288 = smul.u32 128, %s287
        %s289 = smul.u32 16, %s28
        %s290 = smul.u32 2, %s27
        %s291 = ssub.s32 3, %s290
        %p292 = scmp.lt.s32.totalorder %s291, 2
        %s293 = scalar_select %p292, %s291, 2
        %s294 = smul.u32 128, %s293
        %p295 = scmp.eq.s32.totalorder %s28, 0
        // Predicated region
        $region49: #{tpu_custom_call.1} parent=39 // pred_check
          %p296 = pneg %p295
        $region50: #{tpu_custom_call.1} parent=39 // pred_check_branch
          %298 = sbr.rel (%p296) target = $region52
        $region51: #{tpu_custom_call.1} parent=39 // pred_region
          %v299 = vld [vmem:[%s253] sm:$0xff]
          %v300 = vld [vmem:[%s253 + $0x8] sm:$0xff]
          %v301 = vld [vmem:[%s2] sm:$0x1]
          %v303 = vlaneseq
          %v304 = vshrl.u32 %v303, 7
          %v305 = vsub.s32 0, %v304
          %v306 = vrot.slane %v301, %v305
          %v308 = vadd.f32 %v299, %v306
          %v309 = vadd.f32 %v300, %v306
          %310 = vst [vmem:[#allocation2] sm:$0xff] %v308
          %311 = vst [vmem:[#allocation2 + $0x8] sm:$0xff] %v309
        $region52: #{tpu_custom_call.1} parent=39 // pred_fallthru
          _
        %v312 = vld [vmem:[%s253] sm:$0xff]
        %v313 = vld [vmem:[%s253 + $0x8] sm:$0xff]
        %v314 = vld [vmem:[#allocation2] sm:$0xff]
        %v315 = vld [vmem:[#allocation2 + $0x8] sm:$0xff]
        %v316 = vld [vmem:[#allocation6] sm:$0xff]
        %v317 = vld [vmem:[#allocation6 + $0x8] sm:$0xff]
        %v318 = vld [vmem:[#allocation6 + $0x10] sm:$0xff]
        %v319 = vld [vmem:[#allocation6 + $0x18] sm:$0xff]
        %v320 = vld [vmem:[#allocation6 + $0x20] sm:$0xff]
        %v321 = vld [vmem:[#allocation6 + $0x28] sm:$0xff]
        %v322 = vld [vmem:[#allocation6 + $0x30] sm:$0xff]
        %v323 = vld [vmem:[#allocation6 + $0x38] sm:$0xff]
        %v324 = vld [vmem:[#allocation6 + $0x40] sm:$0xff]
        %v325 = vld [vmem:[#allocation6 + $0x48] sm:$0xff]
        %v326 = vld [vmem:[#allocation6 + $0x50] sm:$0xff]
        %v327 = vld [vmem:[#allocation6 + $0x58] sm:$0xff]
        %v328 = vld [vmem:[#allocation6 + $0x60] sm:$0xff]
        %v329 = vld [vmem:[#allocation6 + $0x68] sm:$0xff]
        %v330 = vld [vmem:[#allocation6 + $0x70] sm:$0xff]
        %v331 = vld [vmem:[#allocation6 + $0x78] sm:$0xff]
        %332 = vmatprep.subr.mxu0 0.0
        %333 = vmatpush1.msra.mxu0 %v316
        %334 = vmatprep.subr.mxu0 0.0
        %335 = vmatpush1.msra.mxu0 %v317
        %336 = vmatprep.subr.mxu0 0.0
        %337 = vmatpush1.msra.mxu0 %v318
        %338 = vmatprep.subr.mxu0 0.0
        %339 = vmatpush1.msra.mxu0 %v319
        %340 = vmatprep.subr.mxu0 0.0
        %341 = vmatpush1.msra.mxu0 %v320
        %342 = vmatprep.subr.mxu0 0.0
        %343 = vmatpush1.msra.mxu0 %v321
        %344 = vmatprep.subr.mxu0 0.0
        %345 = vmatpush1.msra.mxu0 %v322
        %346 = vmatprep.subr.mxu0 0.0
        %347 = vmatpush1.msra.mxu0 %v323
        %348 = vmatprep.subr.mxu0 0.0
        %349 = vmatpush1.msra.mxu0 %v324
        %350 = vmatprep.subr.mxu0 0.0
        %351 = vmatpush1.msra.mxu0 %v325
        %352 = vmatprep.subr.mxu0 0.0
        %353 = vmatpush1.msra.mxu0 %v326
        %354 = vmatprep.subr.mxu0 0.0
        %355 = vmatpush1.msra.mxu0 %v327
        %356 = vmatprep.subr.mxu0 0.0
        %357 = vmatpush1.msra.mxu0 %v328
        %358 = vmatprep.subr.mxu0 0.0
        %359 = vmatpush1.msra.mxu0 %v329
        %360 = vmatprep.subr.mxu0 0.0
        %361 = vmatpush1.msra.mxu0 %v330
        %362 = vmatprep.subr.mxu0 0.0
        %363 = vmatpush1.msra.mxu0 %v331
        %364 = vmatprep.subr.mxu0 0.0
        %365 = vmatpush1.msra.mxu0 0.0
        %366 = vmatprep.subr.mxu0 0.0
        %367 = vmatpush1.msra.mxu0 0.0
        %368 = vmatprep.subr.mxu0 0.0
        %369 = vmatpush1.msra.mxu0 0.0
        %370 = vmatprep.subr.mxu0 0.0
        %371 = vmatpush1.msra.mxu0 0.0
        %372 = vmatprep.subr.mxu0 0.0
        %373 = vmatpush1.msra.mxu0 0.0
        %374 = vmatprep.subr.mxu0 0.0
        %375 = vmatpush1.msra.mxu0 0.0
        %376 = vmatprep.subr.mxu0 0.0
        %377 = vmatpush1.msra.mxu0 0.0
        %378 = vmatprep.subr.mxu0 0.0
        %379 = vmatpush1.msra.mxu0 0.0
        %380 = vmatprep.subr.mxu0 0.0
        %381 = vmatpush1.msra.mxu0 0.0
        %382 = vmatprep.subr.mxu0 0.0
        %383 = vmatpush1.msra.mxu0 0.0
        %384 = vmatprep.subr.mxu0 0.0
        %385 = vmatpush1.msra.mxu0 0.0
        %386 = vmatprep.subr.mxu0 0.0
        %387 = vmatpush1.msra.mxu0 0.0
        %388 = vmatprep.subr.mxu0 0.0
        %389 = vmatpush1.msra.mxu0 0.0
        %390 = vmatprep.subr.mxu0 0.0
        %391 = vmatpush1.msra.mxu0 0.0
        %392 = vmatprep.subr.mxu0 0.0
        %393 = vmatpush1.msra.mxu0 0.0
        %394 = vmatprep.subr.mxu0 0.0
        %395 = vmatpush1.msra.mxu0 0.0
        %396 = vmatprep.mubr.f32.mxu0 0.0
        %397 = vmatmul.mubr.f32.gmra.mrb[0].mxu0 %v312
        %v398 = vpop.f32.mrb[0].mxu0
        %v399 = vadd.f32 0.0, %v398
        %v400 = vpop.f32.mrb[0].mxu0
        %401 = vmatprep.mubr.f32.mxu0 0.0
        %402 = vmatmul.mubr.f32.gmra.mrb[0].mxu0 %v313
        %v403 = vpop.f32.mrb[0].mxu0
        %v404 = vadd.f32 0.0, %v403
        %v405 = vpop.f32.mrb[0].mxu0
        %406 = vdwg.mxu0
        %v407 = vadd.f32 %v314, %v399
        %v408 = vadd.f32 %v315, %v404
        %409 = vst [vmem:[#allocation2] sm:$0xff] %v407
        %410 = vst [vmem:[#allocation2 + $0x8] sm:$0xff] %v408
        // Predicated region
        $region53: #{tpu_custom_call.1} parent=39 // pred_check
          %p411 = pneg %p295
        $region54: #{tpu_custom_call.1} parent=39 // pred_check_branch
          %413 = sbr.rel (%p411) target = $region56
        $region55: #{tpu_custom_call.1} parent=39 // pred_region
          %v414 = vld [vmem:[#allocation2] sm:$0xff]
          %v415 = vld [vmem:[#allocation2 + $0x8] sm:$0xff]
          %416 = vadd.xlane.f32.xlu0 %v414
          %v417 = vpop.xlane.xlu0 %416
          %418 = vadd.xlane.f32.xlu0 %v415
          %v419 = vpop.xlane.xlu0 %418
          %v420 = vmul.f32 %v417, 0.0078125
          %v421 = vmul.f32 %v419, 0.0078125
          %v422 = vsub.f32 %v414, %v420
          %v423 = vsub.f32 %v415, %v421
          %v424 = vmul.f32 %v422, %v422
          %v425 = vmul.f32 %v423, %v423
          %426 = vadd.xlane.f32.xlu0 %v424
          %v427 = vpop.xlane.xlu0 %426
          %428 = vadd.xlane.f32.xlu0 %v425
          %v429 = vpop.xlane.xlu0 %428
          %v430 = vmul.f32 %v427, 0.0078125
          %v431 = vmul.f32 %v429, 0.0078125
          %v432 = vadd.f32 %v430, 1e-05
          %v433 = vadd.f32 %v431, 1e-05
          %v434 = vrsqrt.pop %v432
          %v435 = vrsqrt.pop %v433
          %v436 = vld [vmem:[%s3] sm:$0x1]
          %v438 = vlaneseq
          %v439 = vshrl.u32 %v438, 7
          %v440 = vsub.s32 0, %v439
          %v441 = vrot.slane %v436, %v440
          %v443 = vmul.f32 %v434, %v441
          %v444 = vmul.f32 %v435, %v441
          %v445 = vmul.f32 %v422, %v443
          %v446 = vmul.f32 %v423, %v444
          %v447 = vld [vmem:[%s4] sm:$0x1]
          %v449 = vlaneseq
          %v450 = vshrl.u32 %v449, 7
          %v451 = vsub.s32 0, %v450
          %v452 = vrot.slane %v447, %v451
          %v454 = vadd.f32 %v445, %v452
          %v455 = vadd.f32 %v446, %v452
          %456 = vst [vmem:[%s283] sm:$0xff] %v454
          %457 = vst [vmem:[%s283 + $0x8] sm:$0xff] %v455
        $region56: #{tpu_custom_call.1} parent=39 // pred_fallthru
          _
        %s458 = sand.u32 %s158, 1
        %s459 = scalar_lea.sflag [#allocation5], %s458
        %s460 = sand.u32 %s158, 1
        %s461 = smul.addr %s460, 16
        %s462 = scalar_lea.vmem [#allocation8], %s461
        // Predicated region
        $region57: #{tpu_custom_call.1} parent=39 // pred_check
          %p463 = pneg %p168
        $region58: #{tpu_custom_call.1} parent=39 // pred_check_branch
          %465 = sbr.rel (%p463) target = $region60
        $region59: #{tpu_custom_call.1} parent=39 // pred_region
          %s466 = smul.u32 2, %s27
          %s467 = ssub.s32 3, %s466
          %p468 = scmp.lt.s32.totalorder %s467, 2
          %s469 = scalar_select %p468, %s467, 2
          %s470 = smul.u32 128, %s469
          %s472 = ssub.s32 256, %s470
          %473 = vsyncadd %s459, %s472
          %p474 = scmp.ne.s32.totalorder 0, %s470
          %s475 = smul.addr %s466, 128
          %s476 = scalar_lea.hbm %s5, %s475
          %s477 = smul.u32 8, %s469
          %s478 = sshll.u32 %s462, 4
          %s479 = int_to_ptr.vmem [resolvable:$true] %s478
          %s480 = sshll.u32 %s477, 4
          %484 = dma.vmem_to_hbm [thread:$0]  (%p474), %s479, %s480, %s476, %s459, 128, 128, 8
        $region60: #{tpu_custom_call.1} parent=39 // pred_fallthru
          _
      $region40: #{tpu_custom_call.1} parent=5 // pred_fallthru
        _
      %p485 = scmp.le.s32.totalorder 2, %s18
      // Predicated region
      $region61: #{tpu_custom_call.1} parent=5 // pred_check
        %p486 = pneg %p485
      $region62: #{tpu_custom_call.1} parent=5 // pred_check_branch
        %488 = sbr.rel (%p486) target = $region64
      $region63: #{tpu_custom_call.1} parent=5 // pred_region
        %s489 = ssub.s32 %s18, 2
        // Predicated region
        $region65: #{tpu_custom_call.1} parent=63 // pred_check
          %p490 = pneg %p174
        $region66: #{tpu_custom_call.1} parent=63 // pred_check_branch
          %492 = sbr.rel (%p490) target = $region68
        $region67: #{tpu_custom_call.1} parent=63 // pred_region
          %s493 = sand.u32 %s159, 1
          %s494 = scalar_lea.sflag [#allocation5], %s493
          %s495 = sand.u32 %s159, 1
          %s496 = smul.addr %s495, 16
          %s497 = scalar_lea.vmem [#allocation8], %s496
          %498 = dma.done %s494, 256
        $region68: #{tpu_custom_call.1} parent=63 // pred_fallthru
          _
      $region64: #{tpu_custom_call.1} parent=5 // pred_fallthru
        _
    $region6: #{tpu_custom_call.1} parent=1 // loop_footer
      %s22 = sadd.s32 1, %s18
    $region7: #{tpu_custom_call.1} parent=1 // loop_footer_branch
      %17 = sbr.rel target = $region3
    $region8: #{tpu_custom_call.1} parent=1 // loop_exit
      _
    %499 = vsyncpa [#allocation4], 1
    %s500 = scalar_lea.sflag [#allocation4], 1
    %501 = vsyncpa %s500, 1
    %502 = vsyncpa [#allocation7], 1
    %503 = vsyncpa [#allocation5], 1
    %s504 = scalar_lea.sflag [#allocation5], 1
    %505 = vsyncpa %s504, 1

// kernel: tpu_custom_call.1
$region0: #{tpu_custom_call.1}
  #allocation0 [shape = 'u32[]', space=smem, size = 0x4, offset = 0x4, fixed_abs, tag = 'smem constant byte address 0x4 - core index']
  #allocation1 [shape = 'u32[144,128]{1,0:T(1,128)}', space=vmem, size = 0x12000, scoped, tag = 'internal scratch']
  #allocation2 [shape = 'f32[16,128]{1,0:T(8,128)}', space=vmem, size = 0x2000, scoped, tag = 'scratch operand']
  %s0 = inlined_call_operand.hbm [shape: f32[18,128], index: 0, kind: input, shape index: {}]
  %s1 = inlined_call_operand.hbm [shape: f32[128,128], index: 1, kind: input, shape index: {}]
  %s2 = inlined_call_operand.vmem [shape: f32[1,128], index: 2, kind: input, shape index: {}]
  %s3 = inlined_call_operand.vmem [shape: f32[1,128], index: 3, kind: input, shape index: {}]
  %s4 = inlined_call_operand.vmem [shape: f32[1,128], index: 4, kind: input, shape index: {}]
  %s5 = inlined_call_operand.hbm [shape: f32[18,128], index: 5, kind: output, shape index: {}]
  %s6 = sld [smem:[#allocation0]]
  $region69: #{tpu_custom_call.1} parent=0
    _
  %s8 = ssub.s32 1, %s6
  %s9 = scalar_select 0, %s8, %s6
  $region1: #{tpu_custom_call.1} parent=0
    #allocation3 [shape = 'u8[16384]{0}', space=vmem, size = 0x4000, scoped, tag = 'input window, operand 0']
    #allocation4 [shape = 's32[2]{0}', space=sflag, size = 0x8, scoped, tag = 'scoped memory for tpu_custom_call.1']
    #allocation5 [shape = 's32[2]{0}', space=sflag, size = 0x8, scoped, tag = 'scoped memory for tpu_custom_call.1']
    #allocation6 [shape = 'u8[65536]{0}', space=vmem, size = 0x10000, scoped, tag = 'input window, operand 1, single buffered']
    #allocation7 [shape = 's32[1]{0}', space=sflag, size = 0x4, scoped, tag = 'scoped memory for tpu_custom_call.1']
    #allocation8 [shape = 'u8[16384]{0}', space=vmem, size = 0x4000, scoped, tag = 'output window, operand 0']
    %10 = vsyncpa [#allocation4], 0
    %s11 = scalar_lea.sflag [#allocation4], 1
    %12 = vsyncpa %s11, 0
    %13 = vsyncpa [#allocation7], 0
    %14 = vsyncpa [#allocation5], 0
    %s15 = scalar_lea.sflag [#allocation5], 1
    %16 = vsyncpa %s15, 0
    loop: start=0, step=1, limit=4
    $region2: #{tpu_custom_call.1} parent=1 // loop_pre_header
      _
    $region3: #{tpu_custom_call.1} parent=1 // loop_header
      %s18 = sphi 0, %s22
      %p19 = scmp.ge.s32.totalorder %s18, 4
      %s25 = sphi 0, %s37
      %s26 = sphi 0, %s33
      %s27 = sphi 0, %s25
      %s28 = sphi 0, %s26
      %s29 = sphi 0, %s27
      %s30 = sphi 0, %s28
      %s40 = sphi 0, %s42
      %s43 = sphi 0, %s40
      %s44 = sphi 0, %s43
      %s60 = sphi 0, %s44
      %s66 = sphi 0, %s68
      %s69 = sphi 0, %s66
      %s70 = sphi 0, %s69
      %s86 = sphi 0, %s70
      %s90 = sphi 0, %s90
      %s92 = sphi 0, %s90
      %s93 = sphi 0, %s92
      %s107 = sphi 0, %s93
      %s111 = sphi 0, %s111
      %s113 = sphi 0, %s111
      %s114 = sphi 0, %s113
      %s128 = sphi 0, %s114
      %s132 = sphi 0, %s132
      %s134 = sphi 0, %s132
      %s135 = sphi 0, %s134
      %s149 = sphi 0, %s135
      %s155 = sphi 0, %s157
      %s158 = sphi 0, %s155
      %s159 = sphi 0, %s158
      %s175 = sphi 0, %s159
    $region4: #{tpu_custom_call.1} parent=1 // loop_header_branch
      %21 = sbr.rel (%p19) target = $region8
    $region5: #{tpu_custom_call.1} parent=1 // loop_body
      %s23 = ssub.s32 %s18, 1
      %s24 = ssub.s32 %s18, 2
      %s31 = sadd.s32 1, %s26
      %p32 = scmp.ge.s32.totalorder %s31, 1
      %s33 = scalar_select %p32, 0, %s31
      %s34 = sadd.s32 1, %s25
      %s35 = scalar_select %p32, %s34, %s25
      %p36 = scmp.ge.s32.totalorder %s35, 2
      %s37 = scalar_select %p36, 0, %s35
      %s38 = ssub.s32 %s25, %s37
      %p39 = scmp.eq.s32.totalorder %s38, 0
      %s41 = sadd.s32 %s40, 1
      %s42 = scalar_select %p39, %s40, %s41
      %p45 = pneg %p39
      %p46 = scmp.eq.s32.totalorder %s18, 1
      %p47 = por %p45, %p46
      %p48 = scmp.ne.s32.totalorder %s40, %s43
      %p49 = scmp.eq.s32.totalorder %s18, 0
      %p50 = por %p48, %p49
      %p51 = scmp.ne.s32.totalorder %s40, %s43
      %p52 = scmp.eq.s32.totalorder %s23, 1
      %p53 = por %p51, %p52
      %p54 = scmp.ne.s32.totalorder %s43, %s44
      %p55 = scmp.eq.s32.totalorder %s23, 0
      %p56 = por %p54, %p55
      %p57 = scmp.ne.s32.totalorder %s43, %s44
      %p58 = scmp.eq.s32.totalorder %s24, 1
      %p59 = por %p57, %p58
      %p61 = scmp.ne.s32.totalorder %s44, %s60
      %p62 = scmp.eq.s32.totalorder %s24, 0
      %p63 = por %p61, %p62
      %s64 = ssub.s32 %s26, %s33
      %p65 = scmp.eq.s32.totalorder %s64, 0
      %s67 = sadd.s32 %s66, 1
      %s68 = scalar_select %p65, %s66, %s67
      %p71 = pneg %p65
      %p72 = scmp.eq.s32.totalorder %s18, 1
      %p73 = por %p71, %p72
      %p74 = scmp.ne.s32.totalorder %s66, %s69
      %p75 = scmp.eq.s32.totalorder %s18, 0
      %p76 = por %p74, %p75
      %p77 = scmp.ne.s32.totalorder %s66, %s69
      %p78 = scmp.eq.s32.totalorder %s23, 1
      %p79 = por %p77, %p78
      %p80 = scmp.ne.s32.totalorder %s69, %s70
      %p81 = scmp.eq.s32.totalorder %s23, 0
      %p82 = por %p80, %p81
      %p83 = scmp.ne.s32.totalorder %s69, %s70
      %p84 = scmp.eq.s32.totalorder %s24, 1
      %p85 = por %p83, %p84
      %p87 = scmp.ne.s32.totalorder %s70, %s86
      %p88 = scmp.eq.s32.totalorder %s24, 0
      %p89 = por %p87, %p88
      %s91 = sadd.s32 %s90, 1
      %p94 = scmp.eq.s32.totalorder %s18, 1
      %p95 = scmp.ne.s32.totalorder %s90, %s92
      %p96 = scmp.eq.s32.totalorder %s18, 0
      %p97 = por %p95, %p96
      %p98 = scmp.ne.s32.totalorder %s90, %s92
      %p99 = scmp.eq.s32.totalorder %s23, 1
      %p100 = por %p98, %p99
      %p101 = scmp.ne.s32.totalorder %s92, %s93
      %p102 = scmp.eq.s32.totalorder %s23, 0
      %p103 = por %p101, %p102
      %p104 = scmp.ne.s32.totalorder %s92, %s93
      %p105 = scmp.eq.s32.totalorder %s24, 1
      %p106 = por %p104, %p105
      %p108 = scmp.ne.s32.totalorder %s93, %s107
      %p109 = scmp.eq.s32.totalorder %s24, 0
      %p110 = por %p108, %p109
      %s112 = sadd.s32 %s111, 1
      %p115 = scmp.eq.s32.totalorder %s18, 1
      %p116 = scmp.ne.s32.totalorder %s111, %s113
      %p117 = scmp.eq.s32.totalorder %s18, 0
      %p118 = por %p116, %p117
      %p119 = scmp.ne.s32.totalorder %s111, %s113
      %p120 = scmp.eq.s32.totalorder %s23, 1
      %p121 = por %p119, %p120
      %p122 = scmp.ne.s32.totalorder %s113, %s114
      %p123 = scmp.eq.s32.totalorder %s23, 0
      %p124 = por %p122, %p123
      %p125 = scmp.ne.s32.totalorder %s113, %s114
      %p126 = scmp.eq.s32.totalorder %s24, 1
      %p127 = por %p125, %p126
      %p129 = scmp.ne.s32.totalorder %s114, %s128
      %p130 = scmp.eq.s32.totalorder %s24, 0
      %p131 = por %p129, %p130
      %s133 = sadd.s32 %s132, 1
      %p136 = scmp.eq.s32.totalorder %s18, 1
      %p137 = scmp.ne.s32.totalorder %s132, %s134
      %p138 = scmp.eq.s32.totalorder %s18, 0
      %p139 = por %p137, %p138
      %p140 = scmp.ne.s32.totalorder %s132, %s134
      %p141 = scmp.eq.s32.totalorder %s23, 1
      %p142 = por %p140, %p141
      %p143 = scmp.ne.s32.totalorder %s134, %s135
      %p144 = scmp.eq.s32.totalorder %s23, 0
      %p145 = por %p143, %p144
      %p146 = scmp.ne.s32.totalorder %s134, %s135
      %p147 = scmp.eq.s32.totalorder %s24, 1
      %p148 = por %p146, %p147
      %p150 = scmp.ne.s32.totalorder %s135, %s149
      %p151 = scmp.eq.s32.totalorder %s24, 0
      %p152 = por %p150, %p151
      %s153 = ssub.s32 %s25, %s37
      %p154 = scmp.eq.s32.totalorder %s153, 0
      %s156 = sadd.s32 %s155, 1
      %s157 = scalar_select %p154, %s155, %s156
      %p160 = pneg %p154
      %p161 = scmp.eq.s32.totalorder %s18, 1
      %p162 = por %p160, %p161
      %p163 = scmp.ne.s32.totalorder %s155, %s158
      %p164 = scmp.eq.s32.totalorder %s18, 0
      %p165 = por %p163, %p164
      %p166 = scmp.ne.s32.totalorder %s155, %s158
      %p167 = scmp.eq.s32.totalorder %s23, 1
      %p168 = por %p166, %p167
      %p169 = scmp.ne.s32.totalorder %s158, %s159
      %p170 = scmp.eq.s32.totalorder %s23, 0
      %p171 = por %p169, %p170
      %p172 = scmp.ne.s32.totalorder %s158, %s159
      %p173 = scmp.eq.s32.totalorder %s24, 1
      %p174 = por %p172, %p173
      %p176 = scmp.ne.s32.totalorder %s159, %s175
      %p177 = scmp.eq.s32.totalorder %s24, 0
      %p178 = por %p176, %p177
      %p179 = scmp.le.s32.totalorder 1, %s18
      %p180 = scmp.lt.s32.totalorder %s18, 3
      %p181 = pnand %p179, %p180
      %p182 = pneg %p181
      // Predicated region
      $region9: #{tpu_custom_call.1} parent=5 // pred_check
        _
      $region10: #{tpu_custom_call.1} parent=5 // pred_check_branch
        %184 = sbr.rel (%p181) target = $region12
      $region11: #{tpu_custom_call.1} parent=5 // pred_region
        %s185 = ssub.s32 %s18, 1
        // Predicated region
        $region13: #{tpu_custom_call.1} parent=11 // pred_check
          %p186 = pneg %p82
        $region14: #{tpu_custom_call.1} parent=11 // pred_check_branch
          %188 = sbr.rel (%p186) target = $region16
        $region15: #{tpu_custom_call.1} parent=11 // pred_region
          %s189 = smul.u32 16, %s28
          %s191 = ssub.s32 2048, 2048
          %192 = vsyncadd [#allocation7], %s191
          %s193 = smul.addr %s189, 128
          %s194 = scalar_lea.hbm %s1, %s193
          %s195 = sshll.u32 [#allocation6], 4
          %s196 = int_to_ptr.vmem [resolvable:$true] %s195
          %201 = dma.hbm_to_vmem [thread:$0]  %s194, 2048, %s196, [#allocation7], 128, 128, 8
        $region16: #{tpu_custom_call.1} parent=11 // pred_fallthru
          _
        // Predicated region
        $region17: #{tpu_custom_call.1} parent=11 // pred_check
          %p202 = pneg %p103
        $region18: #{tpu_custom_call.1} parent=11 // pred_check_branch
          %204 = sbr.rel (%p202) target = $region20
        $region19: #{tpu_custom_call.1} parent=11 // pred_region
          _
        $region20: #{tpu_custom_call.1} parent=11 // pred_fallthru
          _
        // Predicated region
        $region21: #{tpu_custom_call.1} parent=11 // pred_check
          %p205 = pneg %p124
        $region22: #{tpu_custom_call.1} parent=11 // pred_check_branch
          %207 = sbr.rel (%p205) target = $region24
        $region23: #{tpu_custom_call.1} parent=11 // pred_region
          _
        $region24: #{tpu_custom_call.1} parent=11 // pred_fallthru
          _
        // Predicated region
        $region25: #{tpu_custom_call.1} parent=11 // pred_check
          %p208 = pneg %p145
        $region26: #{tpu_custom_call.1} parent=11 // pred_check_branch
          %210 = sbr.rel (%p208) target = $region28
        $region27: #{tpu_custom_call.1} parent=11 // pred_region
          _
        $region28: #{tpu_custom_call.1} parent=11 // pred_fallthru
          _
      $region12: #{tpu_custom_call.1} parent=5 // pred_fallthru
        _
      %p211 = scmp.lt.s32.totalorder %s18, 2
      // Predicated region
      $region29: #{tpu_custom_call.1} parent=5 // pred_check
        %p212 = pneg %p211
      $region30: #{tpu_custom_call.1} parent=5 // pred_check_branch
        %214 = sbr.rel (%p212) target = $region32
      $region31: #{tpu_custom_call.1} parent=5 // pred_region
        // Predicated region
        $region33: #{tpu_custom_call.1} parent=31 // pred_check
          %p215 = pneg %p50
        $region34: #{tpu_custom_call.1} parent=31 // pred_check_branch
          %217 = sbr.rel (%p215) target = $region36
        $region35: #{tpu_custom_call.1} parent=31 // pred_region
          %s218 = sand.u32 %s40, 1
          %s219 = scalar_lea.sflag [#allocation4], %s218
          %s220 = sand.u32 %s40, 1
          %s221 = smul.addr %s220, 16
          %s222 = scalar_lea.vmem [#allocation3], %s221
          %s223 = smul.u32 2, %s25
          %s224 = ssub.s32 3, %s223
          %p225 = scmp.lt.s32.totalorder %s224, 2
          %s226 = scalar_select %p225, %s224, 2
          %s227 = smul.u32 128, %s226
          %s229 = ssub.s32 256, %s227
          %230 = vsyncadd %s219, %s229
          %p231 = scmp.ne.s32.totalorder 0, %s227
          %s232 = smul.addr %s223, 128
          %s233 = scalar_lea.hbm %s0, %s232
          %s234 = smul.u32 8, %s226
          %s235 = sshll.u32 %s222, 4
          %s236 = int_to_ptr.vmem [resolvable:$true] %s235
          %s237 = sshll.u32 %s234, 4
          %241 = dma.hbm_to_vmem [thread:$0]  (%p231), %s233, %s237, %s236, %s219, 128, 128, 8
        $region36: #{tpu_custom_call.1} parent=31 // pred_fallthru
          _
      $region32: #{tpu_custom_call.1} parent=5 // pred_fallthru
        _
      %p242 = scmp.le.s32.totalorder 1, %s18
      %p243 = scmp.lt.s32.totalorder %s18, 3
      %p244 = pnand %p242, %p243
      %p245 = pneg %p244
      // Predicated region
      $region37: #{tpu_custom_call.1} parent=5 // pred_check
        _
      $region38: #{tpu_custom_call.1} parent=5 // pred_check_branch
        %247 = sbr.rel (%p244) target = $region40
      $region39: #{tpu_custom_call.1} parent=5 // pred_region
        %s248 = ssub.s32 %s18, 1
        %s249 = sand.u32 %s43, 1
        %s250 = scalar_lea.sflag [#allocation4], %s249
        %s251 = sand.u32 %s43, 1
        %s252 = smul.addr %s251, 16
        %s253 = scalar_lea.vmem [#allocation3], %s252
        // Predicated region
        $region41: #{tpu_custom_call.1} parent=39 // pred_check
          %p254 = pneg %p56
        $region42: #{tpu_custom_call.1} parent=39 // pred_check_branch
          %256 = sbr.rel (%p254) target = $region44
        $region43: #{tpu_custom_call.1} parent=39 // pred_region
          %257 = dma.done %s250, 256
        $region44: #{tpu_custom_call.1} parent=39 // pred_fallthru
          _
        // Predicated region
        $region45: #{tpu_custom_call.1} parent=39 // pred_check
          %p258 = pneg %p82
        $region46: #{tpu_custom_call.1} parent=39 // pred_check_branch
          %260 = sbr.rel (%p258) target = $region48
        $region47: #{tpu_custom_call.1} parent=39 // pred_region
          %261 = dma.done [#allocation7], 2048
        $region48: #{tpu_custom_call.1} parent=39 // pred_fallthru
          _
        %s262 = sand.u32 %s43, 1
        %s263 = scalar_lea.sflag [#allocation4], %s262
        %s264 = sand.u32 %s43, 1
        %s265 = smul.addr %s264, 16
        %s266 = scalar_lea.vmem [#allocation3], %s265
        %p267 = pneg %p56
        %p268 = pneg %p53
        %p269 = pneg %p82
        %p270 = pneg %p79
        %p271 = pneg %p103
        %p272 = pneg %p100
        %p273 = pneg %p124
        %p274 = pneg %p121
        %p275 = pneg %p145
        %p276 = pneg %p142
        %p277 = pneg %p171
        %p278 = pneg %p168
        %s279 = sand.u32 %s158, 1
        %s280 = scalar_lea.sflag [#allocation5], %s279
        %s281 = sand.u32 %s158, 1
        %s282 = smul.addr %s281, 16
        %s283 = scalar_lea.vmem [#allocation8], %s282
        %s284 = smul.u32 2, %s27
        %s285 = ssub.s32 3, %s284
        %p286 = scmp.lt.s32.totalorder %s285, 2
        %s287 = scalar_select %p286, %s285, 2
        %s288 = smul.u32 128, %s287
        %s289 = smul.u32 16, %s28
        %s290 = smul.u32 2, %s27
        %s291 = ssub.s32 3, %s290
        %p292 = scmp.lt.s32.totalorder %s291, 2
        %s293 = scalar_select %p292, %s291, 2
        %s294 = smul.u32 128, %s293
        %p295 = scmp.eq.s32.totalorder %s28, 0
        // Predicated region
        $region49: #{tpu_custom_call.1} parent=39 // pred_check
          %p296 = pneg %p295
        $region50: #{tpu_custom_call.1} parent=39 // pred_check_branch
          %298 = sbr.rel (%p296) target = $region52
        $region51: #{tpu_custom_call.1} parent=39 // pred_region
          %v299 = vld [vmem:[%s253] sm:$0xff]
          %v300 = vld [vmem:[%s253 + $0x8] sm:$0xff]
          %v301 = vld [vmem:[%s2] sm:$0x1]
          %v303 = vlaneseq
          %v304 = vshrl.u32 %v303, 7
          %v305 = vsub.s32 0, %v304
          %v306 = vrot.slane %v301, %v305
          %v308 = vadd.f32 %v299, %v306
          %v309 = vadd.f32 %v300, %v306
          %310 = vst [vmem:[#allocation2] sm:$0xff] %v308
          %311 = vst [vmem:[#allocation2 + $0x8] sm:$0xff] %v309
        $region52: #{tpu_custom_call.1} parent=39 // pred_fallthru
          _
        %v312 = vld [vmem:[%s253] sm:$0xff]
        %v313 = vld [vmem:[%s253 + $0x8] sm:$0xff]
        %v314 = vld [vmem:[#allocation2] sm:$0xff]
        %v315 = vld [vmem:[#allocation2 + $0x8] sm:$0xff]
        %v316 = vld [vmem:[#allocation6] sm:$0xff]
        %v317 = vld [vmem:[#allocation6 + $0x8] sm:$0xff]
        %v318 = vld [vmem:[#allocation6 + $0x10] sm:$0xff]
        %v319 = vld [vmem:[#allocation6 + $0x18] sm:$0xff]
        %v320 = vld [vmem:[#allocation6 + $0x20] sm:$0xff]
        %v321 = vld [vmem:[#allocation6 + $0x28] sm:$0xff]
        %v322 = vld [vmem:[#allocation6 + $0x30] sm:$0xff]
        %v323 = vld [vmem:[#allocation6 + $0x38] sm:$0xff]
        %v324 = vld [vmem:[#allocation6 + $0x40] sm:$0xff]
        %v325 = vld [vmem:[#allocation6 + $0x48] sm:$0xff]
        %v326 = vld [vmem:[#allocation6 + $0x50] sm:$0xff]
        %v327 = vld [vmem:[#allocation6 + $0x58] sm:$0xff]
        %v328 = vld [vmem:[#allocation6 + $0x60] sm:$0xff]
        %v329 = vld [vmem:[#allocation6 + $0x68] sm:$0xff]
        %v330 = vld [vmem:[#allocation6 + $0x70] sm:$0xff]
        %v331 = vld [vmem:[#allocation6 + $0x78] sm:$0xff]
        %332 = vmatprep.subr.mxu0 0.0
        %333 = vmatpush1.msra.mxu0 %v316
        %334 = vmatprep.subr.mxu0 0.0
        %335 = vmatpush1.msra.mxu0 %v317
        %336 = vmatprep.subr.mxu0 0.0
        %337 = vmatpush1.msra.mxu0 %v318
        %338 = vmatprep.subr.mxu0 0.0
        %339 = vmatpush1.msra.mxu0 %v319
        %340 = vmatprep.subr.mxu0 0.0
        %341 = vmatpush1.msra.mxu0 %v320
        %342 = vmatprep.subr.mxu0 0.0
        %343 = vmatpush1.msra.mxu0 %v321
        %344 = vmatprep.subr.mxu0 0.0
        %345 = vmatpush1.msra.mxu0 %v322
        %346 = vmatprep.subr.mxu0 0.0
        %347 = vmatpush1.msra.mxu0 %v323
        %348 = vmatprep.subr.mxu0 0.0
        %349 = vmatpush1.msra.mxu0 %v324
        %350 = vmatprep.subr.mxu0 0.0
        %351 = vmatpush1.msra.mxu0 %v325
        %352 = vmatprep.subr.mxu0 0.0
        %353 = vmatpush1.msra.mxu0 %v326
        %354 = vmatprep.subr.mxu0 0.0
        %355 = vmatpush1.msra.mxu0 %v327
        %356 = vmatprep.subr.mxu0 0.0
        %357 = vmatpush1.msra.mxu0 %v328
        %358 = vmatprep.subr.mxu0 0.0
        %359 = vmatpush1.msra.mxu0 %v329
        %360 = vmatprep.subr.mxu0 0.0
        %361 = vmatpush1.msra.mxu0 %v330
        %362 = vmatprep.subr.mxu0 0.0
        %363 = vmatpush1.msra.mxu0 %v331
        %364 = vmatprep.subr.mxu0 0.0
        %365 = vmatpush1.msra.mxu0 0.0
        %366 = vmatprep.subr.mxu0 0.0
        %367 = vmatpush1.msra.mxu0 0.0
        %368 = vmatprep.subr.mxu0 0.0
        %369 = vmatpush1.msra.mxu0 0.0
        %370 = vmatprep.subr.mxu0 0.0
        %371 = vmatpush1.msra.mxu0 0.0
        %372 = vmatprep.subr.mxu0 0.0
        %373 = vmatpush1.msra.mxu0 0.0
        %374 = vmatprep.subr.mxu0 0.0
        %375 = vmatpush1.msra.mxu0 0.0
        %376 = vmatprep.subr.mxu0 0.0
        %377 = vmatpush1.msra.mxu0 0.0
        %378 = vmatprep.subr.mxu0 0.0
        %379 = vmatpush1.msra.mxu0 0.0
        %380 = vmatprep.subr.mxu0 0.0
        %381 = vmatpush1.msra.mxu0 0.0
        %382 = vmatprep.subr.mxu0 0.0
        %383 = vmatpush1.msra.mxu0 0.0
        %384 = vmatprep.subr.mxu0 0.0
        %385 = vmatpush1.msra.mxu0 0.0
        %386 = vmatprep.subr.mxu0 0.0
        %387 = vmatpush1.msra.mxu0 0.0
        %388 = vmatprep.subr.mxu0 0.0
        %389 = vmatpush1.msra.mxu0 0.0
        %390 = vmatprep.subr.mxu0 0.0
        %391 = vmatpush1.msra.mxu0 0.0
        %392 = vmatprep.subr.mxu0 0.0
        %393 = vmatpush1.msra.mxu0 0.0
        %394 = vmatprep.subr.mxu0 0.0
        %395 = vmatpush1.msra.mxu0 0.0
        %396 = vmatprep.mubr.f32.mxu0 0.0
        %397 = vmatmul.mubr.f32.gmra.mrb[0].mxu0 %v312
        %v398 = vpop.f32.mrb[0].mxu0
        %v399 = vadd.f32 0.0, %v398
        %v400 = vpop.f32.mrb[0].mxu0
        %401 = vmatprep.mubr.f32.mxu0 0.0
        %402 = vmatmul.mubr.f32.gmra.mrb[0].mxu0 %v313
        %v403 = vpop.f32.mrb[0].mxu0
        %v404 = vadd.f32 0.0, %v403
        %v405 = vpop.f32.mrb[0].mxu0
        %406 = vdwg.mxu0
        %v407 = vadd.f32 %v314, %v399
        %v408 = vadd.f32 %v315, %v404
        %409 = vst [vmem:[#allocation2] sm:$0xff] %v407
        %410 = vst [vmem:[#allocation2 + $0x8] sm:$0xff] %v408
        // Predicated region
        $region53: #{tpu_custom_call.1} parent=39 // pred_check
          %p411 = pneg %p295
        $region54: #{tpu_custom_call.1} parent=39 // pred_check_branch
          %413 = sbr.rel (%p411) target = $region56
        $region55: #{tpu_custom_call.1} parent=39 // pred_region
          %v414 = vld [vmem:[#allocation2] sm:$0xff]
          %v415 = vld [vmem:[#allocation2 + $0x8] sm:$0xff]
          %416 = vadd.xlane.f32.xlu0 %v414
          %v417 = vpop.xlane.xlu0 %416
          %418 = vadd.xlane.f32.xlu0 %v415
          %v419 = vpop.xlane.xlu0 %418
          %v420 = vmul.f32 %v417, 0.0078125
          %v421 = vmul.f32 %v419, 0.0078125
          %v422 = vsub.f32 %v414, %v420
          %v423 = vsub.f32 %v415, %v421
          %v424 = vmul.f32 %v422, %v422
          %v425 = vmul.f32 %v423, %v423
          %426 = vadd.xlane.f32.xlu0 %v424
          %v427 = vpop.xlane.xlu0 %426
          %428 = vadd.xlane.f32.xlu0 %v425
          %v429 = vpop.xlane.xlu0 %428
          %v430 = vmul.f32 %v427, 0.0078125
          %v431 = vmul.f32 %v429, 0.0078125
          %v432 = vadd.f32 %v430, 1e-05
          %v433 = vadd.f32 %v431, 1e-05
          %v434 = vrsqrt.pop %v432
          %v435 = vrsqrt.pop %v433
          %v436 = vld [vmem:[%s3] sm:$0x1]
          %v438 = vlaneseq
          %v439 = vshrl.u32 %v438, 7
          %v440 = vsub.s32 0, %v439
          %v441 = vrot.slane %v436, %v440
          %v443 = vmul.f32 %v434, %v441
          %v444 = vmul.f32 %v435, %v441
          %v445 = vmul.f32 %v422, %v443
          %v446 = vmul.f32 %v423, %v444
          %v447 = vld [vmem:[%s4] sm:$0x1]
          %v449 = vlaneseq
          %v450 = vshrl.u32 %v449, 7
          %v451 = vsub.s32 0, %v450
          %v452 = vrot.slane %v447, %v451
          %v454 = vadd.f32 %v445, %v452
          %v455 = vadd.f32 %v446, %v452
          %456 = vst [vmem:[%s283] sm:$0xff] %v454
          %457 = vst [vmem:[%s283 + $0x8] sm:$0xff] %v455
        $region56: #{tpu_custom_call.1} parent=39 // pred_fallthru
          _
        %s458 = sand.u32 %s158, 1
        %s459 = scalar_lea.sflag [#allocation5], %s458
        %s460 = sand.u32 %s158, 1
        %s461 = smul.addr %s460, 16
        %s462 = scalar_lea.vmem [#allocation8], %s461
        // Predicated region
        $region57: #{tpu_custom_call.1} parent=39 // pred_check
          %p463 = pneg %p168
        $region58: #{tpu_custom_call.1} parent=39 // pred_check_branch
          %465 = sbr.rel (%p463) target = $region60
        $region59: #{tpu_custom_call.1} parent=39 // pred_region
          %s466 = smul.u32 2, %s27
          %s467 = ssub.s32 3, %s466
          %p468 = scmp.lt.s32.totalorder %s467, 2
          %s469 = scalar_select %p468, %s467, 2
          %s470 = smul.u32 128, %s469
          %s472 = ssub.s32 256, %s470
          %473 = vsyncadd %s459, %s472
          %p474 = scmp.ne.s32.totalorder 0, %s470
          %s475 = smul.addr %s466, 128
          %s476 = scalar_lea.hbm %s5, %s475
          %s477 = smul.u32 8, %s469
          %s478 = sshll.u32 %s462, 4
          %s479 = int_to_ptr.vmem [resolvable:$true] %s478
          %s480 = sshll.u32 %s477, 4
          %484 = dma.vmem_to_hbm [thread:$0]  (%p474), %s479, %s480, %s476, %s459, 128, 128, 8
        $region60: #{tpu_custom_call.1} parent=39 // pred_fallthru
          _
      $region40: #{tpu_custom_call.1} parent=5 // pred_fallthru
        _
      %p485 = scmp.le.s32.totalorder 2, %s18
      // Predicated region
      $region61: #{tpu_custom_call.1} parent=5 // pred_check
        %p486 = pneg %p485
      $region62: #{tpu_custom_call.1} parent=5 // pred_check_branch
        %488 = sbr.rel (%p486) target = $region64
      $region63: #{tpu_custom_call.1} parent=5 // pred_region
        %s489 = ssub.s32 %s18, 2
        // Predicated region
        $region65: #{tpu_custom_call.1} parent=63 // pred_check
          %p490 = pneg %p174
        $region66: #{tpu_custom_call.1} parent=63 // pred_check_branch
          %492 = sbr.rel (%p490) target = $region68
        $region67: #{tpu_custom_call.1} parent=63 // pred_region
          %s493 = sand.u32 %s159, 1
          %s494 = scalar_lea.sflag [#allocation5], %s493
          %s495 = sand.u32 %s159, 1
          %s496 = smul.addr %s495, 16
          %s497 = scalar_lea.vmem [#allocation8], %s496
          %498 = dma.done %s494, 256
        $region68: #{tpu_custom_call.1} parent=63 // pred_fallthru
          _
      $region64: #{tpu_custom_call.1} parent=5 // pred_fallthru
        _
    $region6: #{tpu_custom_call.1} parent=1 // loop_footer
      %s22 = sadd.s32 1, %s18
    $region7: #{tpu_custom_call.1} parent=1 // loop_footer_branch
      %17 = sbr.rel target = $region3
    $region8: #{tpu_custom_call.1} parent=1 // loop_exit
      _
    %499 = vsyncpa [#allocation4], 1
    %s500 = scalar_lea.sflag [#allocation4], 1
    %501 = vsyncpa %s500, 1
    %502 = vsyncpa [#allocation7], 1
    %503 = vsyncpa [#allocation5], 1
    %s504 = scalar_lea.sflag [#allocation5], 1
    %505 = vsyncpa %s504, 1

</llo_original>
